<compile_context>
chip_gen: v5e
topology: v5e:2x2
jax: 0.10.0
libtpu: 0.0.40
codegen_flags: <defaults>
</compile_context>

<pallas_src>
import math
import jax
import jax.numpy as jnp
from jax.experimental import pallas as pl
from jax.experimental.pallas import tpu as pltpu


def _round_up(x, m):
    return ((x + m - 1) // m) * m


def _cdiv(a, b):
    return -(-a // b)


def _vmem_budget_bytes():
    """Usable per-call VMEM budget (~75% of physical: ~96 MiB v5e/v6e, ~48 MiB v7x)."""
    try:
        cap = pltpu.get_tpu_info().vmem_capacity_bytes
    except Exception:
        cap = 64 << 20  # conservative fallback (v7x per-TC VMEM)
    return int(cap) * 3 // 4


def _neuron_kernel(x_ref, wt_ref, b_ref, o_ref):
    # x_ref : [TM, Kp]      padded input tile (feature axis = lane axis)
    # wt_ref: [2*Kp, TN]    fused pre-transposed weights [[W0^T],[W1^T]] (N tile)
    # b_ref : [1, TN]       padded bias tile
    # o_ref : [TM, TN]
    kp = x_ref.shape[-1]
    x = x_ref[...]
    wdt = wt_ref.dtype
    # Square in the input precision (f32), cast only at the dot input (matters
    # when the weight slab is bf16).  Slices of wt_ref are 128-row aligned, so
    # they are free views -- no concat / no [TM, 2*Kp] temp.
    xq = (x * x).astype(wdt)
    xl = x.astype(wdt)
    acc = jnp.dot(xq, wt_ref[:kp, :], preferred_element_type=jnp.float32)
    acc = acc + jnp.dot(xl, wt_ref[kp:, :], preferred_element_type=jnp.float32)
    acc = acc + b_ref[...].astype(jnp.float32)
    o_ref[...] = acc.astype(o_ref.dtype)


def fuse_custom_neuron_params(w0, w1, bias=None, *, weight_dtype=None):
    """One-time (init-time) fusion of CustomNeuronLayer('x**2 + x') parameters.

    Returns (wt, b2d):
      wt  : [2*Kp, Np]  rows [0,Kp) = W0^T (x**2 term), rows [Kp,2Kp) = W1^T (x term)
      b2d : [1, Np]     zero-padded bias (zeros if bias is None)
    Call once and reuse across forwards -- re-fusing per call costs 2-3x the
    weight HBM traffic that dominates the small-batch regime.
    """
    out_features, in_features = w0.shape
    kp = _round_up(in_features, 128)
    np_ = _round_up(out_features, 128)
    wdt = weight_dtype if weight_dtype is not None else w0.dtype
    wt = jnp.zeros((2 * kp, np_), wdt)
    wt = wt.at[:in_features, :out_features].set(w0.T.astype(wdt))
    wt = wt.at[kp:kp + in_features, :out_features].set(w1.T.astype(wdt))
    if bias is None:
        b2d = jnp.zeros((1, np_), jnp.float32)
    else:
        b2d = jnp.zeros((1, np_), bias.dtype).at[0, :out_features].set(bias)
    return wt, b2d


def custom_neuron_layer_fused(x, wt, b2d, out_features, *, tm_max=512,
                              min_batch_tiles=1):
    """out = (x*x) @ W0.T + x @ W1.T + bias, with pre-fused weights `wt`."""
    batch, in_features = x.shape
    kp2, np_ = wt.shape
    kp = kp2 // 2
    assert kp % 128 == 0 and np_ % 128 == 0 and kp >= in_features

    xsize = x.dtype.itemsize
    wsize = wt.dtype.itemsize
    cap = _vmem_budget_bytes()

    # ---- batch tiling: adaptive tm, avoid padding more than ~12.5% ----------
    bp8 = _round_up(batch, 8)
    if bp8 <= tm_max:
        tm = bp8
    else:
        tm = 8
        max_waste = max(bp8 // 8, 8)
        for cand in (512, 256, 128, 64, 32, 16, 8):
            if cand > tm_max:
                continue
            if _round_up(bp8, cand) - bp8 <= max_waste:
                tm = cand
                break
    if min_batch_tiles > 1:
        # e.g. min_batch_tiles=2 on v7x (compute-bound) so "parallel" shards
        # the batch axis across both TensorCores.
        tm = min(tm, max(8, _round_up(_cdiv(bp8, min_batch_tiles), 8)))
    bp = _round_up(bp8, tm)

    # ---- N tiling only if the weight slab doesn't fit the VMEM budget -------
    def _fits(tn, wbuf):
        need = (2 * kp * tn * wsize * wbuf        # weight slab buffer(s)
                + tn * b2d.dtype.itemsize * 2     # bias (tiny)
                + tm * kp * xsize * 2             # x double buffer
                + tm * tn * xsize * 2             # out double buffer
                + tm * kp * 4 + 2 * tm * tn * 4   # x*x temp + f32 partials
                + (2 << 20))                      # headroom
        return need <= cap

    n128 = np_ // 128
    if _fits(np_, 1):
        tn, wbuf = np_, 1                         # resident slab, single-buffered
    else:
        tn, wbuf = 128, 2
        for ntiles in range(2, n128 + 1):
            if n128 % ntiles:
                continue
            cand = np_ // ntiles
            if _fits(cand, 2):
                tn, wbuf = cand, 2
                break
    nn = np_ // tn
    nm = bp // tm

    # ---- activation padding fast path ----------------------------------------
    if bp == batch and kp == in_features:
        xp = x
    else:
        xp = jnp.zeros((bp, kp), x.dtype).at[:batch, :in_features].set(x)

    flops = 2 * bp * (2 * kp) * np_ + 2 * bp * np_
    bytes_accessed = int(bp * kp * xsize * nn
                         + 2 * kp * np_ * wsize
                         + np_ * b2d.dtype.itemsize
                         + bp * np_ * xsize)

    def _call(single_buffer_invariants):
        if single_buffer_invariants and wbuf == 1:
            # Grid-invariant operands: one pipeline buffer is enough.
            wt_spec = pl.BlockSpec((2 * kp, tn), lambda j, i: (0, j),
                                   pipeline_mode=pl.Buffered(1))
            b_spec = pl.BlockSpec((1, tn), lambda j, i: (0, j),
                                  pipeline_mode=pl.Buffered(1))
        else:
            wt_spec = pl.BlockSpec((2 * kp, tn), lambda j, i: (0, j))
            b_spec = pl.BlockSpec((1, tn), lambda j, i: (0, j))
        return pl.pallas_call(
            _neuron_kernel,
            out_shape=jax.ShapeDtypeStruct((bp, np_), x.dtype),
            grid=(nn, nm),  # N outer: each weight tile DMA'd exactly once
            in_specs=[
                pl.BlockSpec((tm, kp), lambda j, i: (i, 0)),   # x: batch-tiled
                wt_spec,                                       # fused weights
                b_spec,                                        # bias
            ],
            out_specs=pl.BlockSpec((tm, tn), lambda j, i: (i, j)),
            compiler_params=pltpu.CompilerParams(
                dimension_semantics=("parallel", "parallel"),
                vmem_limit_bytes=cap),
            cost_estimate=pl.CostEstimate(flops=flops, transcendentals=0,
                                          bytes_accessed=bytes_accessed),
        )(xp, wt, b2d)

    try:
        out_padded = _call(True)
    except Exception:
        # Fallback if pipeline_mode=pl.Buffered(1) is unsupported on this jax.
        out_padded = _call(False)

    if bp == batch and np_ == out_features:
        return out_padded
    return out_padded[:batch, :out_features]


def custom_neuron_layer(x, w0, w1, bias=None, **kwargs):
    """Convenience path: fuses per call. Prefer fuse_custom_neuron_params once."""
    wt, b2d = fuse_custom_neuron_params(w0, w1, bias)
    return custom_neuron_layer_fused(x, wt, b2d, w0.shape[0], **kwargs)


def init_params(key, in_features, out_features):
    """Matches PyTorch reset_parameters(): kaiming_uniform_(a=sqrt(5)) =>
    U(-1/sqrt(fan_in), 1/sqrt(fan_in)) per weight, same bound for bias."""
    k0, k1, kb = jax.random.split(key, 3)
    bound = 1.0 / math.sqrt(in_features)
    w0 = jax.random.uniform(k0, (out_features, in_features), jnp.float32, -bound, bound)
    w1 = jax.random.uniform(k1, (out_features, in_features), jnp.float32, -bound, bound)
    b = jax.random.uniform(kb, (out_features,), jnp.float32, -bound, bound)
    return w0, w1, b


if __name__ == "__main__":
    key = jax.random.PRNGKey(0)
    kx, kparams = jax.random.split(key)

    batch, in_features, out_features = 8, 32, 16
    x = jax.random.normal(kx, (batch, in_features), jnp.float32)
    w0, w1, b = init_params(kparams, in_features, out_features)

    # Fuse parameters once (init-time), then run the forward kernel.
    wt, b2d = fuse_custom_neuron_params(w0, w1, b)
    out = custom_neuron_layer_fused(x, wt, b2d, out_features)
    out = jax.block_until_ready(out)

    # Pure-JAX reference of the PyTorch forward (x**2 + x).
    ref = (x * x) @ w0.T + x @ w1.T + b
    assert out.shape == (batch, out_features)
    assert jnp.allclose(out, ref, atol=1e-5, rtol=1e-5)

    print("KERNEL_OK")
</pallas_src>

<mosaic_0001>
module attributes {stable_mosaic.version = 11 : i64} {
  func.func @_neuron_kernel(%arg0: i32, %arg1: i32, %arg2: memref<8x128xf32, #tpu.memory_space<vmem>>, %arg3: memref<256x128xf32, #tpu.memory_space<vmem>>, %arg4: memref<1x128xf32, #tpu.memory_space<vmem>>, %arg5: memref<8x128xf32, #tpu.memory_space<vmem>>) attributes {dimension_semantics = [#tpu.dimension_semantics<parallel>, #tpu.dimension_semantics<parallel>], iteration_bounds = array<i64: 1, 1>, scalar_prefetch = 0 : i64, scratch_operands = 0 : i64, tpu.core_type = #tpu.core_type<tc>, window_params = [{transform_indices = @transform_0, window_bounds = array<i64: 8, 128>}, {pipeline_mode = #tpu.pipeline_mode<synchronous>, transform_indices = @transform_1, window_bounds = array<i64: 256, 128>}, {pipeline_mode = #tpu.pipeline_mode<synchronous>, transform_indices = @transform_2, window_bounds = array<i64: 1, 128>}, {transform_indices = @transform_3, window_bounds = array<i64: 8, 128>}]} {
    %c0 = arith.constant 0 : index
    %c0_0 = arith.constant 0 : index
    %0 = vector.load %arg2[%c0, %c0_0] : memref<8x128xf32, #tpu.memory_space<vmem>>, vector<8x128xf32>
    %1 = arith.mulf %0, %0 : vector<8x128xf32>
    %c0_1 = arith.constant 0 : index
    %c0_2 = arith.constant 0 : index
    %2 = vector.load %arg3[%c0_1, %c0_2] : memref<256x128xf32, #tpu.memory_space<vmem>>, vector<128x128xf32>
    %cst = arith.constant dense<0.000000e+00> : vector<8x128xf32>
    %3 = tpu.matmul %1, %2, %cst {dimension_numbers = #tpu.dot_dimension_numbers<[1], [0], [0], [1], [0, 0, 1, 1], [], []>} : vector<8x128xf32>, vector<128x128xf32>, vector<8x128xf32> -> vector<8x128xf32>
    %c128 = arith.constant 128 : index
    %c0_3 = arith.constant 0 : index
    %4 = vector.load %arg3[%c128, %c0_3] : memref<256x128xf32, #tpu.memory_space<vmem>>, vector<128x128xf32>
    %cst_4 = arith.constant dense<0.000000e+00> : vector<8x128xf32>
    %5 = tpu.matmul %0, %4, %cst_4 {dimension_numbers = #tpu.dot_dimension_numbers<[1], [0], [0], [1], [0, 0, 1, 1], [], []>} : vector<8x128xf32>, vector<128x128xf32>, vector<8x128xf32> -> vector<8x128xf32>
    %6 = arith.addf %3, %5 : vector<8x128xf32>
    %c0_5 = arith.constant 0 : index
    %c0_6 = arith.constant 0 : index
    %7 = vector.load %arg4[%c0_5, %c0_6] : memref<1x128xf32, #tpu.memory_space<vmem>>, vector<1x128xf32>
    %8 = vector.broadcast %7 : vector<1x128xf32> to vector<8x128xf32>
    %9 = arith.addf %6, %8 : vector<8x128xf32>
    %c0_7 = arith.constant 0 : index
    %c0_8 = arith.constant 0 : index
    %10 = vector.load %arg5[%c0_7, %c0_8] : memref<8x128xf32, #tpu.memory_space<vmem>>, vector<8x128xf32>
    tpu.vector_store %arg5[%c0_7, %c0_8], %9 {strides = array<i32>} : memref<8x128xf32, #tpu.memory_space<vmem>>, vector<8x128xf32>,
    return
  }
  func.func @transform_0(%arg0: i32, %arg1: i32) -> (i32, i32) {
    %c0_i32 = arith.constant 0 : i32
    %c0_i32_0 = arith.constant 0 : i32
    return %arg1, %c0_i32 : i32, i32
  }
  func.func @transform_1(%arg0: i32, %arg1: i32) -> (i32, i32) {
    %c0_i32 = arith.constant 0 : i32
    %c0_i32_0 = arith.constant 0 : i32
    return %c0_i32, %arg0 : i32, i32
  }
  func.func @transform_2(%arg0: i32, %arg1: i32) -> (i32, i32) {
    %c0_i32 = arith.constant 0 : i32
    %c0_i32_0 = arith.constant 0 : i32
    return %c0_i32, %arg0 : i32, i32
  }
  func.func @transform_3(%arg0: i32, %arg1: i32) -> (i32, i32) {
    %c0_i32 = arith.constant 0 : i32
    return %arg1, %arg0 : i32, i32
  }
}

module attributes {stable_mosaic.version = 11 : i64} {
  func.func @_neuron_kernel(%arg0: i32, %arg1: i32, %arg2: memref<8x128xf32, #tpu.memory_space<vmem>>, %arg3: memref<256x128xf32, #tpu.memory_space<vmem>>, %arg4: memref<1x128xf32, #tpu.memory_space<vmem>>, %arg5: memref<8x128xf32, #tpu.memory_space<vmem>>) attributes {dimension_semantics = [#tpu.dimension_semantics<parallel>, #tpu.dimension_semantics<parallel>], iteration_bounds = array<i64: 1, 1>, scalar_prefetch = 0 : i64, scratch_operands = 0 : i64, tpu.core_type = #tpu.core_type<tc>, window_params = [{transform_indices = @transform_0, window_bounds = array<i64: 8, 128>}, {transform_indices = @transform_1, window_bounds = array<i64: 256, 128>}, {transform_indices = @transform_2, window_bounds = array<i64: 1, 128>}, {transform_indices = @transform_3, window_bounds = array<i64: 8, 128>}]} {
    %c0 = arith.constant 0 : index
    %c0_0 = arith.constant 0 : index
    %0 = vector.load %arg2[%c0, %c0_0] : memref<8x128xf32, #tpu.memory_space<vmem>>, vector<8x128xf32>
    %1 = arith.mulf %0, %0 : vector<8x128xf32>
    %c0_1 = arith.constant 0 : index
    %c0_2 = arith.constant 0 : index
    %2 = vector.load %arg3[%c0_1, %c0_2] : memref<256x128xf32, #tpu.memory_space<vmem>>, vector<128x128xf32>
    %cst = arith.constant dense<0.000000e+00> : vector<8x128xf32>
    %3 = tpu.matmul %1, %2, %cst {dimension_numbers = #tpu.dot_dimension_numbers<[1], [0], [0], [1], [0, 0, 1, 1], [], []>} : vector<8x128xf32>, vector<128x128xf32>, vector<8x128xf32> -> vector<8x128xf32>
    %c128 = arith.constant 128 : index
    %c0_3 = arith.constant 0 : index
    %4 = vector.load %arg3[%c128, %c0_3] : memref<256x128xf32, #tpu.memory_space<vmem>>, vector<128x128xf32>
    %cst_4 = arith.constant dense<0.000000e+00> : vector<8x128xf32>
    %5 = tpu.matmul %0, %4, %cst_4 {dimension_numbers = #tpu.dot_dimension_numbers<[1], [0], [0], [1], [0, 0, 1, 1], [], []>} : vector<8x128xf32>, vector<128x128xf32>, vector<8x128xf32> -> vector<8x128xf32>
    %6 = arith.addf %3, %5 : vector<8x128xf32>
    %c0_5 = arith.constant 0 : index
    %c0_6 = arith.constant 0 : index
    %7 = vector.load %arg4[%c0_5, %c0_6] : memref<1x128xf32, #tpu.memory_space<vmem>>, vector<1x128xf32>
    %8 = vector.broadcast %7 : vector<1x128xf32> to vector<8x128xf32>
    %9 = arith.addf %6, %8 : vector<8x128xf32>
    %c0_7 = arith.constant 0 : index
    %c0_8 = arith.constant 0 : index
    %10 = vector.load %arg5[%c0_7, %c0_8] : memref<8x128xf32, #tpu.memory_space<vmem>>, vector<8x128xf32>
    tpu.vector_store %arg5[%c0_7, %c0_8], %9 {strides = array<i32>} : memref<8x128xf32, #tpu.memory_space<vmem>>, vector<8x128xf32>,
    return
  }
  func.func @transform_0(%arg0: i32, %arg1: i32) -> (i32, i32) {
    %c0_i32 = arith.constant 0 : i32
    %c0_i32_0 = arith.constant 0 : i32
    return %arg1, %c0_i32 : i32, i32
  }
  func.func @transform_1(%arg0: i32, %arg1: i32) -> (i32, i32) {
    %c0_i32 = arith.constant 0 : i32
    %c0_i32_0 = arith.constant 0 : i32
    return %c0_i32, %arg0 : i32, i32
  }
  func.func @transform_2(%arg0: i32, %arg1: i32) -> (i32, i32) {
    %c0_i32 = arith.constant 0 : i32
    %c0_i32_0 = arith.constant 0 : i32
    return %c0_i32, %arg0 : i32, i32
  }
  func.func @transform_3(%arg0: i32, %arg1: i32) -> (i32, i32) {
    %c0_i32 = arith.constant 0 : i32
    return %arg1, %arg0 : i32, i32
  }
}

</mosaic_0001>

<llo_original>
// kernel: tpu_custom_call.1
$region0: #{tpu_custom_call.1}
  #allocation0 [shape = 'u32[]', space=smem, size = 0x4, offset = 0x4, fixed_abs, tag = 'smem constant byte address 0x4 - core index']
  #allocation1 [shape = 'u32[72,128]{1,0:T(1,128)}', space=vmem, size = 0x9000, scoped, tag = 'internal scratch']
  %s0 = inlined_call_operand.hbm [shape: f32[8,128], index: 0, kind: input, shape index: {}]
  %s1 = inlined_call_operand.hbm [shape: f32[256,128], index: 1, kind: input, shape index: {}]
  %s2 = inlined_call_operand.vmem [shape: f32[1,128], index: 2, kind: input, shape index: {}]
  %s3 = inlined_call_operand.hbm [shape: f32[8,128], index: 3, kind: output, shape index: {}]
  %s4 = sld [smem:[#allocation0]]
  $region30: #{tpu_custom_call.1} parent=0
    _
  %s6 = ssub.s32 1, %s4
  %s7 = scalar_select 0, %s6, %s4
  $region1: #{tpu_custom_call.1} parent=0
    #allocation2 [shape = 'u8[4096]{0}', space=vmem, size = 0x1000, scoped, tag = 'input window, operand 0, single buffered']
    #allocation3 [shape = 's32[1]{0}', space=sflag, size = 0x4, scoped, tag = 'scoped memory for tpu_custom_call.1']
    #allocation4 [shape = 's32[1]{0}', space=sflag, size = 0x4, scoped, tag = 'scoped memory for tpu_custom_call.1']
    #allocation5 [shape = 'u8[131072]{0}', space=vmem, size = 0x20000, scoped, tag = 'input window, operand 1, single buffered']
    #allocation6 [shape = 's32[1]{0}', space=sflag, size = 0x4, scoped, tag = 'scoped memory for tpu_custom_call.1']
    #allocation7 [shape = 'u8[4096]{0}', space=vmem, size = 0x1000, scoped, tag = 'output window, operand 0, single buffered']
    %8 = vsyncpa [#allocation3], 0
    %9 = vsyncpa [#allocation6], 0
    %10 = vsyncpa [#allocation4], 0
    // Predicated region
    $region2: #{tpu_custom_call.1} parent=1 // pred_check
      _
    $region3: #{tpu_custom_call.1} parent=1 // pred_check_branch
      %12 = sbr.rel (0) target = $region5
    $region4: #{tpu_custom_call.1} parent=1 // pred_region
      %14 = vsyncadd [#allocation3], 0
      %s16 = sshll.u32 %s0, 4
      %s17 = int_to_ptr.hbm [resolvable:$true] %s16
      %s18 = sshll.u32 [#allocation2], 4
      %s19 = int_to_ptr.vmem [resolvable:$true] %s18
      %21 = dma.hbm_to_vmem [thread:$0]  %s17, 128, %s19, [#allocation3]
    $region5: #{tpu_custom_call.1} parent=1 // pred_fallthru
      _
    // Predicated region
    $region6: #{tpu_custom_call.1} parent=1 // pred_check
      _
    $region7: #{tpu_custom_call.1} parent=1 // pred_check_branch
      %23 = sbr.rel (0) target = $region9
    $region8: #{tpu_custom_call.1} parent=1 // pred_region
      %25 = vsyncadd [#allocation6], 0
      %s26 = sshll.u32 %s1, 4
      %s27 = int_to_ptr.hbm [resolvable:$true] %s26
      %s28 = sshll.u32 [#allocation5], 4
      %s29 = int_to_ptr.vmem [resolvable:$true] %s28
      %34 = dma.hbm_to_vmem [thread:$0]  %s27, 4096, %s29, [#allocation6], 128, 128, 8
    $region9: #{tpu_custom_call.1} parent=1 // pred_fallthru
      _
    // Predicated region
    $region10: #{tpu_custom_call.1} parent=1 // pred_check
      _
    $region11: #{tpu_custom_call.1} parent=1 // pred_check_branch
      %36 = sbr.rel (0) target = $region13
    $region12: #{tpu_custom_call.1} parent=1 // pred_region
      _
    $region13: #{tpu_custom_call.1} parent=1 // pred_fallthru
      _
    // Predicated region
    $region14: #{tpu_custom_call.1} parent=1 // pred_check
      _
    $region15: #{tpu_custom_call.1} parent=1 // pred_check_branch
      %38 = sbr.rel (0) target = $region17
    $region16: #{tpu_custom_call.1} parent=1 // pred_region
      %40 = dma.done [#allocation3], 128
    $region17: #{tpu_custom_call.1} parent=1 // pred_fallthru
      _
    // Predicated region
    $region18: #{tpu_custom_call.1} parent=1 // pred_check
      _
    $region19: #{tpu_custom_call.1} parent=1 // pred_check_branch
      %42 = sbr.rel (0) target = $region21
    $region20: #{tpu_custom_call.1} parent=1 // pred_region
      %44 = dma.done [#allocation6], 4096
    $region21: #{tpu_custom_call.1} parent=1 // pred_fallthru
      _
    %v45 = vld [vmem:[#allocation2] sm:$0xff]
    %v46 = vmul.f32 %v45, %v45
    %v47 = vld [vmem:[#allocation5] sm:$0xff]
    %v48 = vld [vmem:[#allocation5 + $0x8] sm:$0xff]
    %v49 = vld [vmem:[#allocation5 + $0x10] sm:$0xff]
    %v50 = vld [vmem:[#allocation5 + $0x18] sm:$0xff]
    %v51 = vld [vmem:[#allocation5 + $0x20] sm:$0xff]
    %v52 = vld [vmem:[#allocation5 + $0x28] sm:$0xff]
    %v53 = vld [vmem:[#allocation5 + $0x30] sm:$0xff]
    %v54 = vld [vmem:[#allocation5 + $0x38] sm:$0xff]
    %v55 = vld [vmem:[#allocation5 + $0x40] sm:$0xff]
    %v56 = vld [vmem:[#allocation5 + $0x48] sm:$0xff]
    %v57 = vld [vmem:[#allocation5 + $0x50] sm:$0xff]
    %v58 = vld [vmem:[#allocation5 + $0x58] sm:$0xff]
    %v59 = vld [vmem:[#allocation5 + $0x60] sm:$0xff]
    %v60 = vld [vmem:[#allocation5 + $0x68] sm:$0xff]
    %v61 = vld [vmem:[#allocation5 + $0x70] sm:$0xff]
    %v62 = vld [vmem:[#allocation5 + $0x78] sm:$0xff]
    %v63 = vld [vmem:[#allocation5 + $0x80] sm:$0xff]
    %v64 = vld [vmem:[#allocation5 + $0x88] sm:$0xff]
    %v65 = vld [vmem:[#allocation5 + $0x90] sm:$0xff]
    %v66 = vld [vmem:[#allocation5 + $0x98] sm:$0xff]
    %v67 = vld [vmem:[#allocation5 + $0xa0] sm:$0xff]
    %v68 = vld [vmem:[#allocation5 + $0xa8] sm:$0xff]
    %v69 = vld [vmem:[#allocation5 + $0xb0] sm:$0xff]
    %v70 = vld [vmem:[#allocation5 + $0xb8] sm:$0xff]
    %v71 = vld [vmem:[#allocation5 + $0xc0] sm:$0xff]
    %v72 = vld [vmem:[#allocation5 + $0xc8] sm:$0xff]
    %v73 = vld [vmem:[#allocation5 + $0xd0] sm:$0xff]
    %v74 = vld [vmem:[#allocation5 + $0xd8] sm:$0xff]
    %v75 = vld [vmem:[#allocation5 + $0xe0] sm:$0xff]
    %v76 = vld [vmem:[#allocation5 + $0xe8] sm:$0xff]
    %v77 = vld [vmem:[#allocation5 + $0xf0] sm:$0xff]
    %v78 = vld [vmem:[#allocation5 + $0xf8] sm:$0xff]
    %79 = vmatpush.msra.mxu0 %v78
    %80 = vmatpush.msra.mxu0 %v77
    %81 = vmatpush.msra.mxu0 %v76
    %82 = vmatpush.msra.mxu0 %v75
    %83 = vmatpush.msra.mxu0 %v74
    %84 = vmatpush.msra.mxu0 %v73
    %85 = vmatpush.msra.mxu0 %v72
    %86 = vmatpush.msra.mxu0 %v71
    %87 = vmatpush.msra.mxu0 %v70
    %88 = vmatpush.msra.mxu0 %v69
    %89 = vmatpush.msra.mxu0 %v68
    %90 = vmatpush.msra.mxu0 %v67
    %91 = vmatpush.msra.mxu0 %v66
    %92 = vmatpush.msra.mxu0 %v65
    %93 = vmatpush.msra.mxu0 %v64
    %94 = vmatpush.msra.mxu0 %v63
    %95 = vmatmul.f32.gmra.mxu0 %v45
    %v96 = vpop.f32.mrf.mxu0
    %v97 = vadd.f32 0.0, %v96
    %98 = vdwg.mxu0
    %99 = vmatpush.msra.mxu0 %v62
    %100 = vmatpush.msra.mxu0 %v61
    %101 = vmatpush.msra.mxu0 %v60
    %102 = vmatpush.msra.mxu0 %v59
    %103 = vmatpush.msra.mxu0 %v58
    %104 = vmatpush.msra.mxu0 %v57
    %105 = vmatpush.msra.mxu0 %v56
    %106 = vmatpush.msra.mxu0 %v55
    %107 = vmatpush.msra.mxu0 %v54
    %108 = vmatpush.msra.mxu0 %v53
    %109 = vmatpush.msra.mxu0 %v52
    %110 = vmatpush.msra.mxu0 %v51
    %111 = vmatpush.msra.mxu0 %v50
    %112 = vmatpush.msra.mxu0 %v49
    %113 = vmatpush.msra.mxu0 %v48
    %114 = vmatpush.msra.mxu0 %v47
    %115 = vmatmul.f32.gmra.mxu0 %v46
    %v116 = vpop.f32.mrf.mxu0
    %v117 = vadd.f32 %v97, %v116
    %118 = vdwg.mxu0
    %v119 = vld [vmem:[%s2] sm:$0x1]
    %v121 = vperm.slane %v119, 0
    %v123 = vadd.f32 %v117, %v121
    %124 = vst [vmem:[#allocation7] sm:$0xff] %v123
    // Predicated region
    $region22: #{tpu_custom_call.1} parent=1 // pred_check
      _
    $region23: #{tpu_custom_call.1} parent=1 // pred_check_branch
      %126 = sbr.rel (0) target = $region25
    $region24: #{tpu_custom_call.1} parent=1 // pred_region
      %128 = vsyncadd [#allocation4], 0
      %s130 = sshll.u32 [#allocation7], 4
      %s131 = int_to_ptr.vmem [resolvable:$true] %s130
      %s132 = sshll.u32 %s3, 4
      %s133 = int_to_ptr.hbm [resolvable:$true] %s132
      %135 = dma.vmem_to_hbm [thread:$0]  %s131, 128, %s133, [#allocation4]
    $region25: #{tpu_custom_call.1} parent=1 // pred_fallthru
      _
    // Predicated region
    $region26: #{tpu_custom_call.1} parent=1 // pred_check
      _
    $region27: #{tpu_custom_call.1} parent=1 // pred_check_branch
      %137 = sbr.rel (0) target = $region29
    $region28: #{tpu_custom_call.1} parent=1 // pred_region
      %139 = dma.done [#allocation4], 128
    $region29: #{tpu_custom_call.1} parent=1 // pred_fallthru
      _
    %140 = vsyncpa [#allocation3], 1
    %141 = vsyncpa [#allocation6], 1
    %142 = vsyncpa [#allocation4], 1

// kernel: tpu_custom_call.1
$region0: #{tpu_custom_call.1}
  #allocation0 [shape = 'u32[]', space=smem, size = 0x4, offset = 0x4, fixed_abs, tag = 'smem constant byte address 0x4 - core index']
  #allocation1 [shape = 'u32[72,128]{1,0:T(1,128)}', space=vmem, size = 0x9000, scoped, tag = 'internal scratch']
  %s0 = inlined_call_operand.hbm [shape: f32[8,128], index: 0, kind: input, shape index: {}]
  %s1 = inlined_call_operand.hbm [shape: f32[256,128], index: 1, kind: input, shape index: {}]
  %s2 = inlined_call_operand.vmem [shape: f32[1,128], index: 2, kind: input, shape index: {}]
  %s3 = inlined_call_operand.hbm [shape: f32[8,128], index: 3, kind: output, shape index: {}]
  %s4 = sld [smem:[#allocation0]]
  $region30: #{tpu_custom_call.1} parent=0
    _
  %s6 = ssub.s32 1, %s4
  %s7 = scalar_select 0, %s6, %s4
  $region1: #{tpu_custom_call.1} parent=0
    #allocation2 [shape = 'u8[4096]{0}', space=vmem, size = 0x1000, scoped, tag = 'input window, operand 0, single buffered']
    #allocation3 [shape = 's32[1]{0}', space=sflag, size = 0x4, scoped, tag = 'scoped memory for tpu_custom_call.1']
    #allocation4 [shape = 's32[1]{0}', space=sflag, size = 0x4, scoped, tag = 'scoped memory for tpu_custom_call.1']
    #allocation5 [shape = 'u8[131072]{0}', space=vmem, size = 0x20000, scoped, tag = 'input window, operand 1, single buffered']
    #allocation6 [shape = 's32[1]{0}', space=sflag, size = 0x4, scoped, tag = 'scoped memory for tpu_custom_call.1']
    #allocation7 [shape = 'u8[4096]{0}', space=vmem, size = 0x1000, scoped, tag = 'output window, operand 0, single buffered']
    %8 = vsyncpa [#allocation3], 0
    %9 = vsyncpa [#allocation6], 0
    %10 = vsyncpa [#allocation4], 0
    // Predicated region
    $region2: #{tpu_custom_call.1} parent=1 // pred_check
      _
    $region3: #{tpu_custom_call.1} parent=1 // pred_check_branch
      %12 = sbr.rel (0) target = $region5
    $region4: #{tpu_custom_call.1} parent=1 // pred_region
      %14 = vsyncadd [#allocation3], 0
      %s16 = sshll.u32 %s0, 4
      %s17 = int_to_ptr.hbm [resolvable:$true] %s16
      %s18 = sshll.u32 [#allocation2], 4
      %s19 = int_to_ptr.vmem [resolvable:$true] %s18
      %21 = dma.hbm_to_vmem [thread:$0]  %s17, 128, %s19, [#allocation3]
    $region5: #{tpu_custom_call.1} parent=1 // pred_fallthru
      _
    // Predicated region
    $region6: #{tpu_custom_call.1} parent=1 // pred_check
      _
    $region7: #{tpu_custom_call.1} parent=1 // pred_check_branch
      %23 = sbr.rel (0) target = $region9
    $region8: #{tpu_custom_call.1} parent=1 // pred_region
      %25 = vsyncadd [#allocation6], 0
      %s26 = sshll.u32 %s1, 4
      %s27 = int_to_ptr.hbm [resolvable:$true] %s26
      %s28 = sshll.u32 [#allocation5], 4
      %s29 = int_to_ptr.vmem [resolvable:$true] %s28
      %34 = dma.hbm_to_vmem [thread:$0]  %s27, 4096, %s29, [#allocation6], 128, 128, 8
    $region9: #{tpu_custom_call.1} parent=1 // pred_fallthru
      _
    // Predicated region
    $region10: #{tpu_custom_call.1} parent=1 // pred_check
      _
    $region11: #{tpu_custom_call.1} parent=1 // pred_check_branch
      %36 = sbr.rel (0) target = $region13
    $region12: #{tpu_custom_call.1} parent=1 // pred_region
      _
    $region13: #{tpu_custom_call.1} parent=1 // pred_fallthru
      _
    // Predicated region
    $region14: #{tpu_custom_call.1} parent=1 // pred_check
      _
    $region15: #{tpu_custom_call.1} parent=1 // pred_check_branch
      %38 = sbr.rel (0) target = $region17
    $region16: #{tpu_custom_call.1} parent=1 // pred_region
      %40 = dma.done [#allocation3], 128
    $region17: #{tpu_custom_call.1} parent=1 // pred_fallthru
      _
    // Predicated region
    $region18: #{tpu_custom_call.1} parent=1 // pred_check
      _
    $region19: #{tpu_custom_call.1} parent=1 // pred_check_branch
      %42 = sbr.rel (0) target = $region21
    $region20: #{tpu_custom_call.1} parent=1 // pred_region
      %44 = dma.done [#allocation6], 4096
    $region21: #{tpu_custom_call.1} parent=1 // pred_fallthru
      _
    %v45 = vld [vmem:[#allocation2] sm:$0xff]
    %v46 = vmul.f32 %v45, %v45
    %v47 = vld [vmem:[#allocation5] sm:$0xff]
    %v48 = vld [vmem:[#allocation5 + $0x8] sm:$0xff]
    %v49 = vld [vmem:[#allocation5 + $0x10] sm:$0xff]
    %v50 = vld [vmem:[#allocation5 + $0x18] sm:$0xff]
    %v51 = vld [vmem:[#allocation5 + $0x20] sm:$0xff]
    %v52 = vld [vmem:[#allocation5 + $0x28] sm:$0xff]
    %v53 = vld [vmem:[#allocation5 + $0x30] sm:$0xff]
    %v54 = vld [vmem:[#allocation5 + $0x38] sm:$0xff]
    %v55 = vld [vmem:[#allocation5 + $0x40] sm:$0xff]
    %v56 = vld [vmem:[#allocation5 + $0x48] sm:$0xff]
    %v57 = vld [vmem:[#allocation5 + $0x50] sm:$0xff]
    %v58 = vld [vmem:[#allocation5 + $0x58] sm:$0xff]
    %v59 = vld [vmem:[#allocation5 + $0x60] sm:$0xff]
    %v60 = vld [vmem:[#allocation5 + $0x68] sm:$0xff]
    %v61 = vld [vmem:[#allocation5 + $0x70] sm:$0xff]
    %v62 = vld [vmem:[#allocation5 + $0x78] sm:$0xff]
    %v63 = vld [vmem:[#allocation5 + $0x80] sm:$0xff]
    %v64 = vld [vmem:[#allocation5 + $0x88] sm:$0xff]
    %v65 = vld [vmem:[#allocation5 + $0x90] sm:$0xff]
    %v66 = vld [vmem:[#allocation5 + $0x98] sm:$0xff]
    %v67 = vld [vmem:[#allocation5 + $0xa0] sm:$0xff]
    %v68 = vld [vmem:[#allocation5 + $0xa8] sm:$0xff]
    %v69 = vld [vmem:[#allocation5 + $0xb0] sm:$0xff]
    %v70 = vld [vmem:[#allocation5 + $0xb8] sm:$0xff]
    %v71 = vld [vmem:[#allocation5 + $0xc0] sm:$0xff]
    %v72 = vld [vmem:[#allocation5 + $0xc8] sm:$0xff]
    %v73 = vld [vmem:[#allocation5 + $0xd0] sm:$0xff]
    %v74 = vld [vmem:[#allocation5 + $0xd8] sm:$0xff]
    %v75 = vld [vmem:[#allocation5 + $0xe0] sm:$0xff]
    %v76 = vld [vmem:[#allocation5 + $0xe8] sm:$0xff]
    %v77 = vld [vmem:[#allocation5 + $0xf0] sm:$0xff]
    %v78 = vld [vmem:[#allocation5 + $0xf8] sm:$0xff]
    %79 = vmatpush.msra.mxu0 %v78
    %80 = vmatpush.msra.mxu0 %v77
    %81 = vmatpush.msra.mxu0 %v76
    %82 = vmatpush.msra.mxu0 %v75
    %83 = vmatpush.msra.mxu0 %v74
    %84 = vmatpush.msra.mxu0 %v73
    %85 = vmatpush.msra.mxu0 %v72
    %86 = vmatpush.msra.mxu0 %v71
    %87 = vmatpush.msra.mxu0 %v70
    %88 = vmatpush.msra.mxu0 %v69
    %89 = vmatpush.msra.mxu0 %v68
    %90 = vmatpush.msra.mxu0 %v67
    %91 = vmatpush.msra.mxu0 %v66
    %92 = vmatpush.msra.mxu0 %v65
    %93 = vmatpush.msra.mxu0 %v64
    %94 = vmatpush.msra.mxu0 %v63
    %95 = vmatmul.f32.gmra.mxu0 %v45
    %v96 = vpop.f32.mrf.mxu0
    %v97 = vadd.f32 0.0, %v96
    %98 = vdwg.mxu0
    %99 = vmatpush.msra.mxu0 %v62
    %100 = vmatpush.msra.mxu0 %v61
    %101 = vmatpush.msra.mxu0 %v60
    %102 = vmatpush.msra.mxu0 %v59
    %103 = vmatpush.msra.mxu0 %v58
    %104 = vmatpush.msra.mxu0 %v57
    %105 = vmatpush.msra.mxu0 %v56
    %106 = vmatpush.msra.mxu0 %v55
    %107 = vmatpush.msra.mxu0 %v54
    %108 = vmatpush.msra.mxu0 %v53
    %109 = vmatpush.msra.mxu0 %v52
    %110 = vmatpush.msra.mxu0 %v51
    %111 = vmatpush.msra.mxu0 %v50
    %112 = vmatpush.msra.mxu0 %v49
    %113 = vmatpush.msra.mxu0 %v48
    %114 = vmatpush.msra.mxu0 %v47
    %115 = vmatmul.f32.gmra.mxu0 %v46
    %v116 = vpop.f32.mrf.mxu0
    %v117 = vadd.f32 %v97, %v116
    %118 = vdwg.mxu0
    %v119 = vld [vmem:[%s2] sm:$0x1]
    %v121 = vperm.slane %v119, 0
    %v123 = vadd.f32 %v117, %v121
    %124 = vst [vmem:[#allocation7] sm:$0xff] %v123
    // Predicated region
    $region22: #{tpu_custom_call.1} parent=1 // pred_check
      _
    $region23: #{tpu_custom_call.1} parent=1 // pred_check_branch
      %126 = sbr.rel (0) target = $region25
    $region24: #{tpu_custom_call.1} parent=1 // pred_region
      %128 = vsyncadd [#allocation4], 0
      %s130 = sshll.u32 [#allocation7], 4
      %s131 = int_to_ptr.vmem [resolvable:$true] %s130
      %s132 = sshll.u32 %s3, 4
      %s133 = int_to_ptr.hbm [resolvable:$true] %s132
      %135 = dma.vmem_to_hbm [thread:$0]  %s131, 128, %s133, [#allocation4]
    $region25: #{tpu_custom_call.1} parent=1 // pred_fallthru
      _
    // Predicated region
    $region26: #{tpu_custom_call.1} parent=1 // pred_check
      _
    $region27: #{tpu_custom_call.1} parent=1 // pred_check_branch
      %137 = sbr.rel (0) target = $region29
    $region28: #{tpu_custom_call.1} parent=1 // pred_region
      %139 = dma.done [#allocation4], 128
    $region29: #{tpu_custom_call.1} parent=1 // pred_fallthru
      _
    %140 = vsyncpa [#allocation3], 1
    %141 = vsyncpa [#allocation6], 1
    %142 = vsyncpa [#allocation4], 1

</llo_original>
